<compile_context>
chip_gen: v5e
topology: v5e:2x2
jax: 0.10.0
libtpu: 0.0.40
codegen_flags: <defaults>
</compile_context>

<pallas_src>
import functools

import jax
import jax.numpy as jnp
from jax import lax
from jax.experimental import pallas as pl
from jax.experimental.pallas import tpu as pltpu


def _round_up(n, m):
    return ((n + m - 1) // m) * m


def _hard_triplet_tile_kernel(margin_ref, xq_ref, xk_ref, sqk_ref,
                              labq_ref, labk_ref, out_ref, *, matmul_dtype):
    """One tile of TQ anchors against all B candidates."""
    xq = xq_ref[...]                                   # (TQ, D), input dtype
    xk = xk_ref[...]                                   # (B,  D), input dtype
    tq = xq.shape[0]
    b = xk.shape[0]

    # --- Gram block on the MXU (bf16 operands, f32 accumulation) ------------
    cor = lax.dot_general(
        xq.astype(matmul_dtype), xk.astype(matmul_dtype),
        dimension_numbers=(((1,), (1,)), ((), ())),
        preferred_element_type=jnp.float32)            # (TQ, B)

    # --- squared pairwise distances -----------------------------------------
    sq_q = jnp.sum(jnp.square(xq.astype(jnp.float32)), axis=1, keepdims=True)  # (TQ,1)
    sq_k = sqk_ref[...]                                # (1, B) f32, precomputed once
    dist_sq = jnp.maximum(sq_q - 2.0 * cor + sq_k, 0.0)          # (TQ, B)

    # Force exact zeros on the diagonal (in the reference the Gram diagonal
    # cancels exactly; with bf16 matmul it would not).
    q0 = pl.program_id(0) * tq
    row_ids = q0 + lax.broadcasted_iota(jnp.int32, (tq, b), 0)
    col_ids = lax.broadcasted_iota(jnp.int32, (tq, b), 1)
    not_diag = row_ids != col_ids
    dist_sq = jnp.where(not_diag, dist_sq, 0.0)

    # --- label masks ----------------------------------------------------------
    same_label = labq_ref[...] == labk_ref[...]        # (TQ, B) bool

    # --- hardest positive (mine on squared distances, sqrt after selection) --
    pos_mask = jnp.logical_and(same_label, not_diag)
    hardest_pos_sq = jnp.max(jnp.where(pos_mask, dist_sq, 0.0),
                             axis=1, keepdims=True)    # (TQ, 1)

    # --- hardest negative -----------------------------------------------------
    max_sq = jnp.max(dist_sq, axis=1, keepdims=True)   # (TQ, 1)
    neg_sq = jnp.where(same_label, dist_sq + max_sq, dist_sq)
    hardest_neg_sq = jnp.min(neg_sq, axis=1, keepdims=True)      # (TQ, 1)

    # --- per-anchor triplet loss ---------------------------------------------
    margin = margin_ref[0]
    out_ref[...] = jnp.maximum(
        jnp.sqrt(hardest_pos_sq) - jnp.sqrt(hardest_neg_sq) + margin, 0.0)


def hard_triplet_loss(embeddings, labels, margin=0.1, *,
                      block_q=None, matmul_dtype=jnp.bfloat16):
    """embeddings: (B, D) float, labels: (B,) int -> scalar f32 loss."""
    B, D = embeddings.shape
    labels = labels.astype(jnp.int32)

    if block_q is None:
        # ~256 anchors/tile is safe on v7x (64 MiB VMEM) and fine on v5e/v6e.
        block_q = min(256, _round_up(B, 8))
    block_q = max(8, _round_up(block_q, 8))
    B_pad = _round_up(B, block_q)
    n_tiles = B_pad // block_q

    # Anchors (rows) may be padded; candidates (columns) are never padded, so
    # no padded-column masking is needed inside the kernel.
    if B_pad != B:
        x_anchor = jnp.pad(embeddings, ((0, B_pad - B), (0, 0)))
        lab_anchor = jnp.pad(labels, (0, B_pad - B)).reshape(B_pad, 1)
    else:
        x_anchor = embeddings
        lab_anchor = labels.reshape(B, 1)
    lab_row = labels.reshape(1, B)

    # Column squared norms: one tiny pass in XLA, resident in VMEM afterwards.
    sq_k = jnp.sum(jnp.square(embeddings.astype(jnp.float32)),
                   axis=1).reshape(1, B)
    margin_arr = jnp.full((1,), margin, dtype=jnp.float32)

    kernel = functools.partial(_hard_triplet_tile_kernel,
                               matmul_dtype=matmul_dtype)

    per_anchor = pl.pallas_call(
        kernel,
        out_shape=jax.ShapeDtypeStruct((B_pad, 1), jnp.float32),
        grid=(n_tiles,),
        in_specs=[
            pl.BlockSpec(memory_space=pltpu.MemorySpace.SMEM),      # margin
            pl.BlockSpec((block_q, D), lambda q: (q, 0)),           # anchors
            pl.BlockSpec((B, D), lambda q: (0, 0)),                 # all x (resident)
            pl.BlockSpec((1, B), lambda q: (0, 0)),                 # col sq-norms
            pl.BlockSpec((block_q, 1), lambda q: (q, 0)),           # anchor labels
            pl.BlockSpec((1, B), lambda q: (0, 0)),                 # all labels
        ],
        out_specs=pl.BlockSpec((block_q, 1), lambda q: (q, 0)),
        compiler_params=pltpu.CompilerParams(
            dimension_semantics=("parallel",)),
    )(margin_arr, x_anchor, embeddings, sq_k, lab_anchor, lab_row)

    # Final mean over the real anchors is free in XLA.
    return jnp.mean(per_anchor[:B, 0])


# ----------------------------------------------------------------------------
# References for validation.
# ----------------------------------------------------------------------------
def _reference_exact(embeddings, labels, margin=0.1):
    """Faithful f32 mirror of the PyTorch module."""
    x = embeddings.astype(jnp.float32)
    cor = x @ x.T
    norm = jnp.diag(cor)
    d2 = jnp.maximum(norm[:, None] - 2.0 * cor + norm[None, :], 0.0)
    zmask = (d2 == 0.0).astype(jnp.float32)
    d = jnp.sqrt(d2 + zmask * 1e-16) * (1.0 - zmask)
    eye = jnp.eye(x.shape[0], dtype=jnp.float32)
    leq = (labels[None, :] == labels[:, None]).astype(jnp.float32)
    hp = jnp.max(d * (1.0 - eye) * leq, axis=1, keepdims=True)
    mx = jnp.max(d, axis=1, keepdims=True)
    hn = jnp.min(d + mx * leq, axis=1, keepdims=True)
    return jnp.mean(jnp.maximum(hp - hn + margin, 0.0))


def _reference_matched(embeddings, labels, margin=0.1, matmul_dtype=jnp.bfloat16):
    """Mirrors the kernel numerics (matmul dtype, f32 norms, zeroed diag)."""
    x = embeddings.astype(jnp.float32)
    xm = x.astype(matmul_dtype)
    cor = lax.dot_general(xm, xm, (((1,), (1,)), ((), ())),
                          preferred_element_type=jnp.float32)
    sq = jnp.sum(jnp.square(x), axis=1)
    d2 = jnp.maximum(sq[:, None] - 2.0 * cor + sq[None, :], 0.0)
    eye = jnp.eye(x.shape[0], dtype=bool)
    d2 = jnp.where(eye, 0.0, d2)
    leq = labels[None, :] == labels[:, None]
    pos = jnp.logical_and(leq, ~eye)
    hp2 = jnp.max(jnp.where(pos, d2, 0.0), axis=1)
    mx2 = jnp.max(d2, axis=1, keepdims=True)
    hn2 = jnp.min(jnp.where(leq, d2 + mx2, d2), axis=1)
    return jnp.mean(jnp.maximum(jnp.sqrt(hp2) - jnp.sqrt(hn2) + margin, 0.0))


if __name__ == "__main__":
    key = jax.random.PRNGKey(0)
    k_emb, k_lab = jax.random.split(key)

    B, D = 16, 32
    embeddings = jax.random.normal(k_emb, (B, D), dtype=jnp.float32)
    labels = jax.random.randint(k_lab, (B,), 0, 3, dtype=jnp.int32)

    # block_q=8 -> 2 grid tiles, exercising the row-tiled path at a tiny size.
    loss = hard_triplet_loss(embeddings, labels, margin=0.1, block_q=8)
    loss = jax.block_until_ready(loss)

    ref_matched = jax.block_until_ready(
        _reference_matched(embeddings, labels, 0.1, jnp.bfloat16))
    ref_exact = jax.block_until_ready(_reference_exact(embeddings, labels, 0.1))

    # Tight check vs a reference mirroring the kernel's bf16 matmul numerics,
    # loose sanity check vs the fully-f32 PyTorch-faithful reference.
    assert jnp.allclose(loss, ref_matched, atol=1e-4, rtol=1e-4), (loss, ref_matched)
    assert jnp.allclose(loss, ref_exact, atol=5e-2, rtol=5e-2), (loss, ref_exact)

    print("KERNEL_OK")
</pallas_src>

<mosaic_0001>
module attributes {stable_mosaic.version = 11 : i64} {
  func.func @_hard_triplet_tile_kernel(%arg0: i32, %arg1: memref<1xf32, #tpu.memory_space<smem>>, %arg2: memref<8x32xf32, #tpu.memory_space<vmem>>, %arg3: memref<16x32xf32, #tpu.memory_space<vmem>>, %arg4: memref<1x16xf32, #tpu.memory_space<vmem>>, %arg5: memref<8x1xi32, #tpu.memory_space<vmem>>, %arg6: memref<1x16xi32, #tpu.memory_space<vmem>>, %arg7: memref<8x1xf32, #tpu.memory_space<vmem>>) attributes {dimension_semantics = [#tpu.dimension_semantics<parallel>], iteration_bounds = array<i64: 2>, scalar_prefetch = 0 : i64, scratch_operands = 0 : i64, tpu.core_type = #tpu.core_type<tc>, window_params = [{transform_indices = @transform_0, window_bounds = array<i64: 1>}, {transform_indices = @transform_1, window_bounds = array<i64: 8, 32>}, {pipeline_mode = #tpu.pipeline_mode<synchronous>, transform_indices = @transform_2, window_bounds = array<i64: 16, 32>}, {pipeline_mode = #tpu.pipeline_mode<synchronous>, transform_indices = @transform_3, window_bounds = array<i64: 1, 16>}, {transform_indices = @transform_4, window_bounds = array<i64: 8, 1>}, {pipeline_mode = #tpu.pipeline_mode<synchronous>, transform_indices = @transform_5, window_bounds = array<i64: 1, 16>}, {transform_indices = @transform_6, window_bounds = array<i64: 8, 1>}]} {
    %c0 = arith.constant 0 : index
    %c0_0 = arith.constant 0 : index
    %0 = vector.load %arg2[%c0, %c0_0] : memref<8x32xf32, #tpu.memory_space<vmem>>, vector<8x32xf32>
    %c0_1 = arith.constant 0 : index
    %c0_2 = arith.constant 0 : index
    %1 = vector.load %arg3[%c0_1, %c0_2] : memref<16x32xf32, #tpu.memory_space<vmem>>, vector<16x32xf32>
    %2 = arith.truncf %0 : vector<8x32xf32> to vector<8x32xbf16>
    %3 = arith.truncf %1 : vector<16x32xf32> to vector<16x32xbf16>
    %cst = arith.constant dense<0.000000e+00> : vector<8x16xf32>
    %4 = tpu.matmul %2, %3, %cst {dimension_numbers = #tpu.dot_dimension_numbers<[1], [1], [0], [0], [0, 0, 1, 0], [], []>} : vector<8x32xbf16>, vector<16x32xbf16>, vector<8x16xf32> -> vector<8x16xf32>
    %5 = arith.mulf %0, %0 : vector<8x32xf32>
    %cst_3 = arith.constant dense<0.000000e+00> : vector<8xf32>
    %6 = vector.multi_reduction <add>, %5, %cst_3 [1] : vector<8x32xf32> to vector<8xf32>
    %7 = vector.shape_cast %6 : vector<8xf32> to vector<8x1xf32>
    %c0_4 = arith.constant 0 : index
    %c0_5 = arith.constant 0 : index
    %8 = vector.load %arg4[%c0_4, %c0_5] : memref<1x16xf32, #tpu.memory_space<vmem>>, vector<1x16xf32>
    %cst_6 = arith.constant 2.000000e+00 : f32
    %9 = vector.broadcast %cst_6 : f32 to vector<8x16xf32>
    %10 = arith.mulf %9, %4 : vector<8x16xf32>
    %11 = vector.broadcast %7 : vector<8x1xf32> to vector<8x16xf32>
    %12 = arith.subf %11, %10 : vector<8x16xf32>
    %13 = vector.broadcast %8 : vector<1x16xf32> to vector<8x16xf32>
    %14 = arith.addf %12, %13 : vector<8x16xf32>
    %cst_7 = arith.constant 0.000000e+00 : f32
    %15 = vector.broadcast %cst_7 : f32 to vector<8x16xf32>
    %16 = arith.maximumf %14, %15 : vector<8x16xf32>
    %c8_i32 = arith.constant 8 : i32
    %17 = arith.muli %arg0, %c8_i32 : i32
    %18 = tpu.iota {dimensions = array<i32: 0>} : vector<8x16xi32>
    %19 = vector.broadcast %17 : i32 to vector<8x16xi32>
    %20 = arith.addi %19, %18 : vector<8x16xi32>
    %21 = tpu.iota {dimensions = array<i32: 1>} : vector<8x16xi32>
    %22 = arith.cmpi ne, %20, %21 : vector<8x16xi32>
    %cst_8 = arith.constant 0.000000e+00 : f32
    %23 = vector.broadcast %cst_8 : f32 to vector<8x16xf32>
    %24 = arith.select %22, %16, %23 : vector<8x16xi1>, vector<8x16xf32>
    %c0_9 = arith.constant 0 : index
    %c0_10 = arith.constant 0 : index
    %25 = vector.load %arg5[%c0_9, %c0_10] : memref<8x1xi32, #tpu.memory_space<vmem>>, vector<8x1xi32>
    %c0_11 = arith.constant 0 : index
    %c0_12 = arith.constant 0 : index
    %26 = vector.load %arg6[%c0_11, %c0_12] : memref<1x16xi32, #tpu.memory_space<vmem>>, vector<1x16xi32>
    %27 = vector.broadcast %25 : vector<8x1xi32> to vector<8x16xi32>
    %28 = vector.broadcast %26 : vector<1x16xi32> to vector<8x16xi32>
    %29 = arith.cmpi eq, %27, %28 : vector<8x16xi32>
    %30 = arith.andi %29, %22 : vector<8x16xi1>
    %cst_13 = arith.constant 0.000000e+00 : f32
    %31 = vector.broadcast %cst_13 : f32 to vector<8x16xf32>
    %32 = arith.select %30, %24, %31 : vector<8x16xi1>, vector<8x16xf32>
    %cst_14 = arith.constant dense<0xFF800000> : vector<8xf32>
    %33 = vector.multi_reduction <maximumf>, %32, %cst_14 [1] : vector<8x16xf32> to vector<8xf32>
    %34 = vector.shape_cast %33 : vector<8xf32> to vector<8x1xf32>
    %cst_15 = arith.constant dense<0xFF800000> : vector<8xf32>
    %35 = vector.multi_reduction <maximumf>, %24, %cst_15 [1] : vector<8x16xf32> to vector<8xf32>
    %36 = vector.shape_cast %35 : vector<8xf32> to vector<8x1xf32>
    %37 = vector.broadcast %36 : vector<8x1xf32> to vector<8x16xf32>
    %38 = arith.addf %24, %37 : vector<8x16xf32>
    %39 = arith.select %29, %38, %24 : vector<8x16xi1>, vector<8x16xf32>
    %cst_16 = arith.constant dense<0x7F800000> : vector<8xf32>
    %40 = vector.multi_reduction <minimumf>, %39, %cst_16 [1] : vector<8x16xf32> to vector<8xf32>
    %41 = vector.shape_cast %40 : vector<8xf32> to vector<8x1xf32>
    %c0_17 = arith.constant 0 : index
    %42 = memref.load %arg1[%c0_17] : memref<1xf32, #tpu.memory_space<smem>>
    %43 = math.sqrt %34 : vector<8x1xf32>
    %44 = math.sqrt %41 : vector<8x1xf32>
    %45 = arith.subf %43, %44 : vector<8x1xf32>
    %46 = vector.broadcast %42 : f32 to vector<8x1xf32>
    %47 = arith.addf %45, %46 : vector<8x1xf32>
    %cst_18 = arith.constant 0.000000e+00 : f32
    %48 = vector.broadcast %cst_18 : f32 to vector<8x1xf32>
    %49 = arith.maximumf %47, %48 : vector<8x1xf32>
    %c0_19 = arith.constant 0 : index
    %c0_20 = arith.constant 0 : index
    %50 = vector.load %arg7[%c0_19, %c0_20] : memref<8x1xf32, #tpu.memory_space<vmem>>, vector<8x1xf32>
    tpu.vector_store %arg7[%c0_19, %c0_20], %49 {strides = array<i32>} : memref<8x1xf32, #tpu.memory_space<vmem>>, vector<8x1xf32>,
    return
  }
  func.func @transform_0(%arg0: i32) -> i32 {
    %c0_i32 = arith.constant 0 : i32
    %c0_i32_0 = arith.constant 0 : i32
    return %c0_i32 : i32
  }
  func.func @transform_1(%arg0: i32) -> (i32, i32) {
    %c0_i32 = arith.constant 0 : i32
    %c0_i32_0 = arith.constant 0 : i32
    return %arg0, %c0_i32 : i32, i32
  }
  func.func @transform_2(%arg0: i32) -> (i32, i32) {
    %c0_i32 = arith.constant 0 : i32
    %c0_i32_0 = arith.constant 0 : i32
    %c0_i32_1 = arith.constant 0 : i32
    return %c0_i32, %c0_i32_0 : i32, i32
  }
  func.func @transform_3(%arg0: i32) -> (i32, i32) {
    %c0_i32 = arith.constant 0 : i32
    %c0_i32_0 = arith.constant 0 : i32
    %c0_i32_1 = arith.constant 0 : i32
    return %c0_i32, %c0_i32_0 : i32, i32
  }
  func.func @transform_4(%arg0: i32) -> (i32, i32) {
    %c0_i32 = arith.constant 0 : i32
    %c0_i32_0 = arith.constant 0 : i32
    return %arg0, %c0_i32 : i32, i32
  }
  func.func @transform_5(%arg0: i32) -> (i32, i32) {
    %c0_i32 = arith.constant 0 : i32
    %c0_i32_0 = arith.constant 0 : i32
    %c0_i32_1 = arith.constant 0 : i32
    return %c0_i32, %c0_i32_0 : i32, i32
  }
  func.func @transform_6(%arg0: i32) -> (i32, i32) {
    %c0_i32 = arith.constant 0 : i32
    %c0_i32_0 = arith.constant 0 : i32
    return %arg0, %c0_i32 : i32, i32
  }
}

</mosaic_0001>

<llo_original>
// kernel: tpu_custom_call.1
$region0: #{tpu_custom_call.1}
  #allocation0 [shape = 'u32[]', space=smem, size = 0x4, offset = 0x4, fixed_abs, tag = 'smem constant byte address 0x4 - core index']
  #allocation1 [shape = 'u32[72,128]{1,0:T(1,128)}', space=vmem, size = 0x9000, scoped, tag = 'internal scratch']
  #allocation2 [shape = 'f32[1]{0:T(128)S(6)}', space=smem, size = 0x200, scoped, tag = 'scoped memory for tpu_custom_call.1']
  %s0 = inlined_call_operand.<no memory space> [shape: f32[1], index: 0, kind: input, shape index: {}]
  %s1 = inlined_call_operand.vmem [shape: f32[16,32], index: 1, kind: input, shape index: {}]
  %s2 = inlined_call_operand.hbm [shape: f32[16,32], index: 2, kind: input, shape index: {}]
  %s3 = inlined_call_operand.vmem [shape: f32[1,16], index: 3, kind: input, shape index: {}]
  %s4 = inlined_call_operand.vmem [shape: s32[16,1], index: 4, kind: input, shape index: {}]
  %s5 = inlined_call_operand.vmem [shape: s32[1,16], index: 5, kind: input, shape index: {}]
  %s6 = inlined_call_operand.vmem [shape: f32[16,1], index: 6, kind: output, shape index: {}]
  %s7 = sld [smem:[#allocation0]]
  $region61: #{tpu_custom_call.1} parent=0
    _
  %s9 = ssub.s32 1, %s7
  %s10 = scalar_select 0, %s9, %s7
  %11 = sst [smem:[#allocation2]] %s0
  $region1: #{tpu_custom_call.1} parent=0
    #allocation3 [shape = 'u8[8192]{0}', space=vmem, size = 0x2000, scoped, tag = 'input window, operand 2, single buffered']
    #allocation4 [shape = 's32[2]{0}', space=sflag, size = 0x8, scoped, tag = 'scoped memory for tpu_custom_call.1']
    %12 = vsyncpa [#allocation4], 0
    loop: start=0, step=1, limit=4
    $region2: #{tpu_custom_call.1} parent=1 // loop_pre_header
      _
    $region3: #{tpu_custom_call.1} parent=1 // loop_header
      %s14 = sphi 0, %s18
      %p15 = scmp.ge.s32.totalorder %s14, 4
      %s22 = sphi 0, %s22
      %s24 = sphi 0, %s22
      %s25 = sphi 0, %s24
      %s39 = sphi 0, %s25
      %s45 = sphi 0, %s47
      %s48 = sphi 0, %s45
      %s49 = sphi 0, %s48
      %s65 = sphi 0, %s49
      %s69 = sphi 0, %s69
      %s71 = sphi 0, %s69
      %s72 = sphi 0, %s71
      %s86 = sphi 0, %s72
      %s90 = sphi 0, %s90
      %s92 = sphi 0, %s90
      %s93 = sphi 0, %s92
      %s107 = sphi 0, %s93
      %s113 = sphi 0, %s115
      %s116 = sphi 0, %s113
      %s117 = sphi 0, %s116
      %s133 = sphi 0, %s117
      %s137 = sphi 0, %s137
      %s139 = sphi 0, %s137
      %s140 = sphi 0, %s139
      %s154 = sphi 0, %s140
      %s160 = sphi 0, %s162
      %s163 = sphi 0, %s160
      %s164 = sphi 0, %s163
      %s180 = sphi 0, %s164
    $region4: #{tpu_custom_call.1} parent=1 // loop_header_branch
      %17 = sbr.rel (%p15) target = $region8
    $region5: #{tpu_custom_call.1} parent=1 // loop_body
      %s19 = ssub.s32 %s14, 1
      %s20 = ssub.s32 %s14, 2
      %s21 = sadd.s32 %s14, 1
      %s23 = sadd.s32 %s22, 1
      %p26 = scmp.eq.s32.totalorder %s14, 1
      %p27 = scmp.ne.s32.totalorder %s22, %s24
      %p28 = scmp.eq.s32.totalorder %s14, 0
      %p29 = por %p27, %p28
      %p30 = scmp.ne.s32.totalorder %s22, %s24
      %p31 = scmp.eq.s32.totalorder %s19, 1
      %p32 = por %p30, %p31
      %p33 = scmp.ne.s32.totalorder %s24, %s25
      %p34 = scmp.eq.s32.totalorder %s19, 0
      %p35 = por %p33, %p34
      %p36 = scmp.ne.s32.totalorder %s24, %s25
      %p37 = scmp.eq.s32.totalorder %s20, 1
      %p38 = por %p36, %p37
      %p40 = scmp.ne.s32.totalorder %s25, %s39
      %p41 = scmp.eq.s32.totalorder %s20, 0
      %p42 = por %p40, %p41
      %s43 = ssub.s32 %s14, %s21
      %p44 = scmp.eq.s32.totalorder %s43, 0
      %s46 = sadd.s32 %s45, 1
      %s47 = scalar_select %p44, %s45, %s46
      %p50 = pneg %p44
      %p51 = scmp.eq.s32.totalorder %s14, 1
      %p52 = por %p50, %p51
      %p53 = scmp.ne.s32.totalorder %s45, %s48
      %p54 = scmp.eq.s32.totalorder %s14, 0
      %p55 = por %p53, %p54
      %p56 = scmp.ne.s32.totalorder %s45, %s48
      %p57 = scmp.eq.s32.totalorder %s19, 1
      %p58 = por %p56, %p57
      %p59 = scmp.ne.s32.totalorder %s48, %s49
      %p60 = scmp.eq.s32.totalorder %s19, 0
      %p61 = por %p59, %p60
      %p62 = scmp.ne.s32.totalorder %s48, %s49
      %p63 = scmp.eq.s32.totalorder %s20, 1
      %p64 = por %p62, %p63
      %p66 = scmp.ne.s32.totalorder %s49, %s65
      %p67 = scmp.eq.s32.totalorder %s20, 0
      %p68 = por %p66, %p67
      %s70 = sadd.s32 %s69, 1
      %p73 = scmp.eq.s32.totalorder %s14, 1
      %p74 = scmp.ne.s32.totalorder %s69, %s71
      %p75 = scmp.eq.s32.totalorder %s14, 0
      %p76 = por %p74, %p75
      %p77 = scmp.ne.s32.totalorder %s69, %s71
      %p78 = scmp.eq.s32.totalorder %s19, 1
      %p79 = por %p77, %p78
      %p80 = scmp.ne.s32.totalorder %s71, %s72
      %p81 = scmp.eq.s32.totalorder %s19, 0
      %p82 = por %p80, %p81
      %p83 = scmp.ne.s32.totalorder %s71, %s72
      %p84 = scmp.eq.s32.totalorder %s20, 1
      %p85 = por %p83, %p84
      %p87 = scmp.ne.s32.totalorder %s72, %s86
      %p88 = scmp.eq.s32.totalorder %s20, 0
      %p89 = por %p87, %p88
      %s91 = sadd.s32 %s90, 1
      %p94 = scmp.eq.s32.totalorder %s14, 1
      %p95 = scmp.ne.s32.totalorder %s90, %s92
      %p96 = scmp.eq.s32.totalorder %s14, 0
      %p97 = por %p95, %p96
      %p98 = scmp.ne.s32.totalorder %s90, %s92
      %p99 = scmp.eq.s32.totalorder %s19, 1
      %p100 = por %p98, %p99
      %p101 = scmp.ne.s32.totalorder %s92, %s93
      %p102 = scmp.eq.s32.totalorder %s19, 0
      %p103 = por %p101, %p102
      %p104 = scmp.ne.s32.totalorder %s92, %s93
      %p105 = scmp.eq.s32.totalorder %s20, 1
      %p106 = por %p104, %p105
      %p108 = scmp.ne.s32.totalorder %s93, %s107
      %p109 = scmp.eq.s32.totalorder %s20, 0
      %p110 = por %p108, %p109
      %s111 = ssub.s32 %s14, %s21
      %p112 = scmp.eq.s32.totalorder %s111, 0
      %s114 = sadd.s32 %s113, 1
      %s115 = scalar_select %p112, %s113, %s114
      %p118 = pneg %p112
      %p119 = scmp.eq.s32.totalorder %s14, 1
      %p120 = por %p118, %p119
      %p121 = scmp.ne.s32.totalorder %s113, %s116
      %p122 = scmp.eq.s32.totalorder %s14, 0
      %p123 = por %p121, %p122
      %p124 = scmp.ne.s32.totalorder %s113, %s116
      %p125 = scmp.eq.s32.totalorder %s19, 1
      %p126 = por %p124, %p125
      %p127 = scmp.ne.s32.totalorder %s116, %s117
      %p128 = scmp.eq.s32.totalorder %s19, 0
      %p129 = por %p127, %p128
      %p130 = scmp.ne.s32.totalorder %s116, %s117
      %p131 = scmp.eq.s32.totalorder %s20, 1
      %p132 = por %p130, %p131
      %p134 = scmp.ne.s32.totalorder %s117, %s133
      %p135 = scmp.eq.s32.totalorder %s20, 0
      %p136 = por %p134, %p135
      %s138 = sadd.s32 %s137, 1
      %p141 = scmp.eq.s32.totalorder %s14, 1
      %p142 = scmp.ne.s32.totalorder %s137, %s139
      %p143 = scmp.eq.s32.totalorder %s14, 0
      %p144 = por %p142, %p143
      %p145 = scmp.ne.s32.totalorder %s137, %s139
      %p146 = scmp.eq.s32.totalorder %s19, 1
      %p147 = por %p145, %p146
      %p148 = scmp.ne.s32.totalorder %s139, %s140
      %p149 = scmp.eq.s32.totalorder %s19, 0
      %p150 = por %p148, %p149
      %p151 = scmp.ne.s32.totalorder %s139, %s140
      %p152 = scmp.eq.s32.totalorder %s20, 1
      %p153 = por %p151, %p152
      %p155 = scmp.ne.s32.totalorder %s140, %s154
      %p156 = scmp.eq.s32.totalorder %s20, 0
      %p157 = por %p155, %p156
      %s158 = ssub.s32 %s14, %s21
      %p159 = scmp.eq.s32.totalorder %s158, 0
      %s161 = sadd.s32 %s160, 1
      %s162 = scalar_select %p159, %s160, %s161
      %p165 = pneg %p159
      %p166 = scmp.eq.s32.totalorder %s14, 1
      %p167 = por %p165, %p166
      %p168 = scmp.ne.s32.totalorder %s160, %s163
      %p169 = scmp.eq.s32.totalorder %s14, 0
      %p170 = por %p168, %p169
      %p171 = scmp.ne.s32.totalorder %s160, %s163
      %p172 = scmp.eq.s32.totalorder %s19, 1
      %p173 = por %p171, %p172
      %p174 = scmp.ne.s32.totalorder %s163, %s164
      %p175 = scmp.eq.s32.totalorder %s19, 0
      %p176 = por %p174, %p175
      %p177 = scmp.ne.s32.totalorder %s163, %s164
      %p178 = scmp.eq.s32.totalorder %s20, 1
      %p179 = por %p177, %p178
      %p181 = scmp.ne.s32.totalorder %s164, %s180
      %p182 = scmp.eq.s32.totalorder %s20, 0
      %p183 = por %p181, %p182
      %p184 = scmp.le.s32.totalorder 1, %s14
      %p185 = scmp.lt.s32.totalorder %s14, 3
      %p186 = pnand %p184, %p185
      %p187 = pneg %p186
      // Predicated region
      $region9: #{tpu_custom_call.1} parent=5 // pred_check
        _
      $region10: #{tpu_custom_call.1} parent=5 // pred_check_branch
        %189 = sbr.rel (%p186) target = $region12
      $region11: #{tpu_custom_call.1} parent=5 // pred_region
        %s190 = ssub.s32 %s14, 1
        // Predicated region
        $region13: #{tpu_custom_call.1} parent=11 // pred_check
          %p191 = pneg %p35
        $region14: #{tpu_custom_call.1} parent=11 // pred_check_branch
          %193 = sbr.rel (%p191) target = $region16
        $region15: #{tpu_custom_call.1} parent=11 // pred_region
          _
        $region16: #{tpu_custom_call.1} parent=11 // pred_fallthru
          _
        // Predicated region
        $region17: #{tpu_custom_call.1} parent=11 // pred_check
          %p194 = pneg %p82
        $region18: #{tpu_custom_call.1} parent=11 // pred_check_branch
          %196 = sbr.rel (%p194) target = $region20
        $region19: #{tpu_custom_call.1} parent=11 // pred_region
          %198 = vsyncadd [#allocation4], 0
          %s199 = sshll.u32 %s2, 4
          %s200 = int_to_ptr.hbm [resolvable:$true] %s199
          %s201 = sshll.u32 [#allocation3], 4
          %s202 = int_to_ptr.vmem [resolvable:$true] %s201
          %207 = dma.hbm_to_vmem [thread:$0]  %s200, 256, %s202, [#allocation4], 128, 128, 8
        $region20: #{tpu_custom_call.1} parent=11 // pred_fallthru
          _
        // Predicated region
        $region21: #{tpu_custom_call.1} parent=11 // pred_check
          %p208 = pneg %p103
        $region22: #{tpu_custom_call.1} parent=11 // pred_check_branch
          %210 = sbr.rel (%p208) target = $region24
        $region23: #{tpu_custom_call.1} parent=11 // pred_region
          _
        $region24: #{tpu_custom_call.1} parent=11 // pred_fallthru
          _
        // Predicated region
        $region25: #{tpu_custom_call.1} parent=11 // pred_check
          %p211 = pneg %p150
        $region26: #{tpu_custom_call.1} parent=11 // pred_check_branch
          %213 = sbr.rel (%p211) target = $region28
        $region27: #{tpu_custom_call.1} parent=11 // pred_region
          _
        $region28: #{tpu_custom_call.1} parent=11 // pred_fallthru
          _
      $region12: #{tpu_custom_call.1} parent=5 // pred_fallthru
        _
      %p214 = scmp.lt.s32.totalorder %s14, 2
      // Predicated region
      $region29: #{tpu_custom_call.1} parent=5 // pred_check
        %p215 = pneg %p214
      $region30: #{tpu_custom_call.1} parent=5 // pred_check_branch
        %217 = sbr.rel (%p215) target = $region32
      $region31: #{tpu_custom_call.1} parent=5 // pred_region
        // Predicated region
        $region33: #{tpu_custom_call.1} parent=31 // pred_check
          %p218 = pneg %p55
        $region34: #{tpu_custom_call.1} parent=31 // pred_check_branch
          %220 = sbr.rel (%p218) target = $region36
        $region35: #{tpu_custom_call.1} parent=31 // pred_region
          %p221 = scmp.lt.s32.totalorder %s14, 1
          %s222 = scalar_select %p221, %s14, 1
          %s223 = smul.addr %s222, 8
          %s224 = scalar_lea.vmem %s1, %s223
        $region36: #{tpu_custom_call.1} parent=31 // pred_fallthru
          _
        // Predicated region
        $region37: #{tpu_custom_call.1} parent=31 // pred_check
          %p225 = pneg %p123
        $region38: #{tpu_custom_call.1} parent=31 // pred_check_branch
          %227 = sbr.rel (%p225) target = $region40
        $region39: #{tpu_custom_call.1} parent=31 // pred_region
          %p228 = scmp.lt.s32.totalorder %s14, 1
          %s229 = scalar_select %p228, %s14, 1
          %s230 = smul.addr %s229, 8
          %s231 = scalar_lea.vmem %s4, %s230
        $region40: #{tpu_custom_call.1} parent=31 // pred_fallthru
          _
      $region32: #{tpu_custom_call.1} parent=5 // pred_fallthru
        _
      %p232 = scmp.le.s32.totalorder 1, %s14
      %p233 = scmp.lt.s32.totalorder %s14, 3
      %p234 = pnand %p232, %p233
      %p235 = pneg %p234
      // Predicated region
      $region41: #{tpu_custom_call.1} parent=5 // pred_check
        _
      $region42: #{tpu_custom_call.1} parent=5 // pred_check_branch
        %237 = sbr.rel (%p234) target = $region44
      $region43: #{tpu_custom_call.1} parent=5 // pred_region
        %s238 = ssub.s32 %s14, 1
        // Predicated region
        $region45: #{tpu_custom_call.1} parent=43 // pred_check
          %p239 = pneg %p82
        $region46: #{tpu_custom_call.1} parent=43 // pred_check_branch
          %241 = sbr.rel (%p239) target = $region48
        $region47: #{tpu_custom_call.1} parent=43 // pred_region
          %243 = dma.done [#allocation4], 256
        $region48: #{tpu_custom_call.1} parent=43 // pred_fallthru
          _
        %p244 = pneg %p35
        %p245 = pneg %p32
        %p246 = scmp.lt.s32.totalorder %s19, 1
        %s247 = scalar_select %p246, %s19, 1
        %s248 = smul.addr %s247, 8
        %s249 = scalar_lea.vmem %s1, %s248
        %p250 = pneg %p61
        %p251 = pneg %p58
        %p252 = pneg %p82
        %p253 = pneg %p79
        %p254 = pneg %p103
        %p255 = pneg %p100
        %p256 = scmp.lt.s32.totalorder %s19, 1
        %s257 = scalar_select %p256, %s19, 1
        %s258 = smul.addr %s257, 8
        %s259 = scalar_lea.vmem %s4, %s258
        %p260 = pneg %p129
        %p261 = pneg %p126
        %p262 = pneg %p150
        %p263 = pneg %p147
        %p264 = pneg %p176
        %p265 = pneg %p173
        %p266 = scmp.lt.s32.totalorder %s19, 1
        %s267 = scalar_select %p266, %s19, 1
        %s268 = smul.addr %s267, 8
        %s269 = scalar_lea.vmem %s6, %s268
        %p270 = scmp.lt.s32.totalorder %s19, 1
        %s271 = scalar_select %p270, %s19, 1
        %s272 = smul.addr %s271, 8
        %s273 = scalar_lea.vmem %s1, %s272
        %p274 = scmp.lt.s32.totalorder %s19, 1
        %s275 = scalar_select %p274, %s19, 1
        %s276 = smul.addr %s275, 8
        %s277 = scalar_lea.vmem %s4, %s276
        %p278 = scmp.lt.s32.totalorder %s19, 1
        %s279 = scalar_select %p278, %s19, 1
        %s280 = smul.addr %s279, 8
        %s281 = scalar_lea.vmem %s6, %s280
        %v283 = vld [vmem:[%s273] sm:$0xff]
        %v284 = vld [vmem:[#allocation3] sm:$0xff]
        %v285 = vld [vmem:[#allocation3 + $0x8] sm:$0xff]
        %v286 = vpack.c.bf16 %v283, %v283
        %v287 = vpack.c.bf16 %v285, %v284
        %vm288 = vcmask 261120
        %v290 = vsel %vm288, %v286, 0
        %v293 = vsel %vm288, %v287, 0
        %295 = vmatpush.bf16.xpose.msra.mxu0 0
        %296 = vmatpush.bf16.xpose.msra.mxu0 0
        %297 = vmatpush.bf16.xpose.msra.mxu0 0
        %298 = vmatpush.bf16.xpose.msra.mxu0 0
        %299 = vmatpush.bf16.xpose.msra.mxu0 0
        %300 = vmatpush.bf16.xpose.msra.mxu0 0
        %301 = vmatpush.bf16.xpose.msra.mxu0 0
        %302 = vmatpush.bf16.xpose.msra.mxu0 %v293
        %303 = vmatmul.bf16.gmra.mxu0 %v290
        %v304 = vpop.f32.mrf.mxu0
        %v305 = vadd.f32 0.0, %v304
        %v306 = vpop.f32.mrf.mxu0
        %307 = vdwg.mxu0
        %v308 = vmul.f32 %v283, %v283
        %v309 = vsel %vm288, %v308, 0.0
        %310 = vadd.xlane.f32.xlu0 %v309
        %v311 = vpop.xlane.xlu0 %310
        %v312 = vld [vmem:[%s3] sm:$0x1]
        %v313 = vmul.f32 %v305, 2.0
        %v314 = vsub.f32 %v311, %v313
        %v316 = vperm.slane %v312, 0
        %v318 = vadd.f32 %v314, %v316
        %v319 = vmax.f32 %v318, 0.0
        %s320 = smul.u32 %s19, 8
        %v321 = vlaneseq
        %v322 = vshrl.u32 %v321, 7
        %v323 = vstv %s320
        %v324 = vadd.s32 %v323, %v322
        %v325 = vlaneseq
        %v326 = vand.u32 %v325, 127
        %vm327 = vcmp.ne.s32.totalorder %v324, %v326
        %v328 = vsel %vm327, %v319, 0.0
        %v329 = vld [vmem:[%s277] sm:$0xff]
        %v330 = vld [vmem:[%s5] sm:$0x1]
        %331 = vset.pattern.permute.xlu0 0
        %332 = vperm.xlu0 %331, %v329
        %v333 = vpop.permute.xlu0 %332
        %v334 = vperm.slane %v330, 0
        %vm335 = vcmp.eq.s32.totalorder %v333, %v334
        %vm336 = vmand %vm335, %vm327
        %v337 = vsel %vm336, %v328, 0.0
        %vm338 = vcmask 130048
        %v339 = vsel %vm338, %v337, -inf
        %340 = vmax.xlane.f32.xlu0 %v339
        %v341 = vpop.xlane.xlu0 %340
        %v342 = vsel %vm338, %v328, -inf
        %343 = vmax.xlane.f32.xlu0 %v342
        %v344 = vpop.xlane.xlu0 %343
        %v345 = vadd.f32 %v328, %v344
        %v346 = vsel %vm335, %v345, %v328
        %v347 = vsel %vm338, %v346, inf
        %348 = vmin.xlane.f32.xlu0 %v347
        %v349 = vpop.xlane.xlu0 %348
        %s350 = sld [smem:[#allocation2]]
        %v351 = vrsqrt.pop %v341
        %v352 = vmul.f32 %v351, %v341
        %v353 = vmul.f32 %v352, %v351
        %v354 = vmul.f32 0.5, %v353
        %v355 = vsub.f32 1.5, %v354
        %v356 = vmul.f32 %v351, %v355
        %v357 = vmul.f32 %v341, %v356
        %vm358 = vcmp.eq.f32.partialorder %v341, inf
        %v359 = vsel %vm358, %v341, %v357
        %vm360 = vcmp.eq.f32.partialorder %v341, 0.0
        %v361 = vand.u32 %v341, 2147483648
        %v362 = vsel %vm360, %v361, %v359
        %v363 = vrsqrt.pop %v349
        %v364 = vmul.f32 %v363, %v349
        %v365 = vmul.f32 %v364, %v363
        %v366 = vmul.f32 0.5, %v365
        %v367 = vsub.f32 1.5, %v366
        %v368 = vmul.f32 %v363, %v367
        %v369 = vmul.f32 %v349, %v368
        %vm370 = vcmp.eq.f32.partialorder %v349, inf
        %v371 = vsel %vm370, %v349, %v369
        %vm372 = vcmp.eq.f32.partialorder %v349, 0.0
        %v373 = vand.u32 %v349, 2147483648
        %v374 = vsel %vm372, %v373, %v371
        %v375 = vsub.f32 %v362, %v374
        %v376 = vstv %s350
        %v377 = vadd.f32 %v375, %v376
        %v378 = vmax.f32 %v377, 0.0
        %vm379 = vcmask 7168
        %380 = vst.msk [vmem:[%s281] sm:$0xff] %vm379, %v378
        %p381 = scmp.lt.s32.totalorder %s19, 1
        %s382 = scalar_select %p381, %s19, 1
        %s383 = smul.addr %s382, 8
        %s384 = scalar_lea.vmem %s6, %s383
        // Predicated region
        $region49: #{tpu_custom_call.1} parent=43 // pred_check
          %p385 = pneg %p173
        $region50: #{tpu_custom_call.1} parent=43 // pred_check_branch
          %387 = sbr.rel (%p385) target = $region52
        $region51: #{tpu_custom_call.1} parent=43 // pred_region
          _
        $region52: #{tpu_custom_call.1} parent=43 // pred_fallthru
          _
      $region44: #{tpu_custom_call.1} parent=5 // pred_fallthru
        _
      %p388 = scmp.le.s32.totalorder 2, %s14
      // Predicated region
      $region53: #{tpu_custom_call.1} parent=5 // pred_check
        %p389 = pneg %p388
      $region54: #{tpu_custom_call.1} parent=5 // pred_check_branch
        %391 = sbr.rel (%p389) target = $region56
      $region55: #{tpu_custom_call.1} parent=5 // pred_region
        %s392 = ssub.s32 %s14, 2
        // Predicated region
        $region57: #{tpu_custom_call.1} parent=55 // pred_check
          %p393 = pneg %p179
        $region58: #{tpu_custom_call.1} parent=55 // pred_check_branch
          %395 = sbr.rel (%p393) target = $region60
        $region59: #{tpu_custom_call.1} parent=55 // pred_region
          %p396 = scmp.lt.s32.totalorder %s20, 1
          %s397 = scalar_select %p396, %s20, 1
          %s398 = smul.addr %s397, 8
          %s399 = scalar_lea.vmem %s6, %s398
        $region60: #{tpu_custom_call.1} parent=55 // pred_fallthru
          _
      $region56: #{tpu_custom_call.1} parent=5 // pred_fallthru
        _
    $region6: #{tpu_custom_call.1} parent=1 // loop_footer
      %s18 = sadd.s32 1, %s14
    $region7: #{tpu_custom_call.1} parent=1 // loop_footer_branch
      %13 = sbr.rel target = $region3
    $region8: #{tpu_custom_call.1} parent=1 // loop_exit
      _
    %400 = vsyncpa [#allocation4], 1
    %s401 = scalar_lea.sflag [#allocation4], 1
    %402 = vsyncpa %s401, 1

</llo_original>
